<compile_context>
chip_gen: v6e
topology: v6e:2x2x1
jax: 0.10.0
libtpu: 0.0.40
codegen_flags: <defaults>
</compile_context>

<pallas_src>
import math

import jax
import jax.numpy as jnp
from jax.experimental import pallas as pl
from jax.experimental.pallas import tpu as pltpu

_INV_SQRT2 = 1.0 / math.sqrt(2.0)
_ALIGN = 256  # lane alignment; matches the 256-wide MXU on v6e/v7x, fine on v5e too.


def _round_up(x: int, m: int) -> int:
    return (x + m - 1) // m * m


def _device_vmem_bytes() -> int:
    """Physical VMEM per TensorCore; conservative (v7x-sized) fallback if the query fails."""
    try:
        return int(pltpu.get_tpu_info().vmem_capacity_bytes)
    except Exception:
        return 64 * 1024 * 1024


def _gelu_exact(h):
    # torch.nn.GELU(approximate='none'): 0.5*x*(1+erf(x/sqrt(2))), computed in f32.
    return 0.5 * h * (1.0 + jax.lax.erf(h * _INV_SQRT2))


# ----------------------------------------------------------------------------- kernels
def _ffn_resident_kernel(x_ref, w1_ref, b1_ref, w2_ref, b2_ref, o_ref):
    """Whole mlp_dim per step; weights have constant index_maps -> DMA'd exactly once."""
    x = x_ref[...].astype(w1_ref.dtype)
    h = jnp.dot(x, w1_ref[...], preferred_element_type=jnp.float32) + b1_ref[...]
    h = _gelu_exact(h)
    # TODO(synk): dropout(p=0.0) is the identity at inference, so no mask is generated here.
    out = jnp.dot(h.astype(w2_ref.dtype), w2_ref[...], preferred_element_type=jnp.float32)
    o_ref[...] = (out + b2_ref[...]).astype(o_ref.dtype)


def _ffn_streamed_kernel(x_ref, w1_ref, b1_ref, w2_ref, b2_ref, o_ref, acc_ref):
    """mlp_dim tiled on inner axis j; second matmul accumulated into an f32 VMEM scratch."""
    j = pl.program_id(1)

    @pl.when(j == 0)
    def _init():
        # Seed the accumulator with b2: added exactly once per output tile, no finalize add.
        acc_ref[...] = jnp.zeros_like(acc_ref) + b2_ref[...]

    x = x_ref[...].astype(w1_ref.dtype)
    h = jnp.dot(x, w1_ref[...], preferred_element_type=jnp.float32) + b1_ref[...]
    h = _gelu_exact(h)
    acc_ref[...] += jnp.dot(h.astype(w2_ref.dtype), w2_ref[...],
                            preferred_element_type=jnp.float32)

    @pl.when(j == pl.num_programs(1) - 1)
    def _finalize():
        o_ref[...] = acc_ref[...].astype(o_ref.dtype)


# ----------------------------------------------------------------------------- param prep
def prepare_ffn_params(w1, b1, w2, b2, *, weight_dtype=None):
    """One-time padding/casting of FFN parameters (hoisted off the forward hot path).

    w1: (dim, mlp_dim)  b1: (mlp_dim,)  w2: (mlp_dim, dim)  b2: (dim,)
    weight_dtype: optionally store weights in bf16 for MXU speed / HBM & VMEM savings.
    """
    w1 = jnp.asarray(w1)
    w2 = jnp.asarray(w2)
    dim, mlp_dim = w1.shape
    assert w2.shape == (mlp_dim, dim)
    dim_p = _round_up(dim, _ALIGN)
    mlp_p = _round_up(mlp_dim, _ALIGN)
    wd = jnp.dtype(weight_dtype) if weight_dtype is not None else w1.dtype

    w1p = jnp.pad(w1.astype(wd), ((0, dim_p - dim), (0, mlp_p - mlp_dim)))
    w2p = jnp.pad(w2.astype(wd), ((0, mlp_p - mlp_dim), (0, dim_p - dim)))
    b1p = jnp.pad(jnp.asarray(b1, jnp.float32).reshape(1, -1), ((0, 0), (0, mlp_p - mlp_dim)))
    b2p = jnp.pad(jnp.asarray(b2, jnp.float32).reshape(1, -1), ((0, 0), (0, dim_p - dim)))
    return {
        "w1": w1p, "b1": b1p, "w2": w2p, "b2": b2p,
        "dim": dim, "mlp_dim": mlp_dim, "dim_p": dim_p, "mlp_p": mlp_p,
    }


# ----------------------------------------------------------------------------- forward
def feed_forward(x, params):
    """x: (B, S, dim). params: output of prepare_ffn_params."""
    B, S, dim = x.shape
    assert dim == params["dim"], (dim, params["dim"])
    dim_p, mlp_p = params["dim_p"], params["mlp_p"]
    w1p, b1p, w2p, b2p = params["w1"], params["b1"], params["w2"], params["b2"]

    dtype = x.dtype
    itemsize = jnp.dtype(dtype).itemsize
    w_itemsize = jnp.dtype(w1p.dtype).itemsize
    M = B * S

    vmem_cap = _device_vmem_bytes()
    big_vmem = vmem_cap >= 100 * 1024 * 1024        # v5e/v6e (128 MiB) vs v7x (64 MiB)
    tm_pref = 512 if big_vmem else 256              # larger token tile where VMEM allows

    wbytes = (w1p.size + w2p.size) * w_itemsize
    bias_bytes = (b1p.size + b2p.size) * 4

    # --- resident vs streamed decision (count default double-buffer alloc for weights) ---
    weights_resident = 2 * wbytes <= 0.45 * vmem_cap
    TM = None
    if weights_resident:
        # Per-token-row VMEM: x/out double-buffered + (TM, mlp_p) f32 GELU intermediate headroom.
        per_row = 4 * dim_p * itemsize + 2 * mlp_p * 4 + dim_p * 4
        budget = int(0.7 * vmem_cap) - 2 * wbytes
        tm_allowed = max(0, (budget // per_row) // 8 * 8)
        if tm_allowed >= min(64, _round_up(M, 8)):
            TM = max(8, min(tm_pref, _round_up(M, 8), tm_allowed))
        else:
            weights_resident = False

    if not weights_resident:
        TM = max(8, min(tm_pref, _round_up(M, 8)))
        TN = 512 if (mlp_p % 512 == 0 and mlp_p >= 512) else min(256, mlp_p)

    M_p = _round_up(M, TM)
    x2 = jnp.pad(x.reshape(M, dim), ((0, M_p - M), (0, dim_p - dim)))

    flops = 4 * M_p * dim_p * mlp_p               # two matmuls, 2 flops/MAC each
    trans = M_p * mlp_p                           # erf per hidden element

    if weights_resident:
        grid = (M_p // TM,)
        est_vmem = (2 * wbytes                                  # weights (double-buffer alloc)
                    + TM * (4 * dim_p * itemsize + 2 * mlp_p * 4)   # x/out tiles + h temps
                    + 2 * bias_bytes)
        vmem_limit = int(min(max(est_vmem * 5 // 4, 32 * 1024 * 1024), int(0.87 * vmem_cap)))
        bytes_accessed = int(x2.size * itemsize + wbytes + bias_bytes + M_p * dim_p * itemsize)

        out = pl.pallas_call(
            _ffn_resident_kernel,
            out_shape=jax.ShapeDtypeStruct((M_p, dim_p), dtype),
            grid=grid,
            in_specs=[
                pl.BlockSpec((TM, dim_p), lambda i: (i, 0)),       # x: tiled over tokens
                pl.BlockSpec((dim_p, mlp_p), lambda i: (0, 0)),    # w1: whole array, DMA'd once
                pl.BlockSpec((1, mlp_p), lambda i: (0, 0)),        # b1
                pl.BlockSpec((mlp_p, dim_p), lambda i: (0, 0)),    # w2: whole array, DMA'd once
                pl.BlockSpec((1, dim_p), lambda i: (0, 0)),        # b2
            ],
            out_specs=pl.BlockSpec((TM, dim_p), lambda i: (i, 0)),
            compiler_params=pltpu.CompilerParams(
                dimension_semantics=("parallel",),
                vmem_limit_bytes=vmem_limit,
            ),
            cost_estimate=pl.CostEstimate(
                flops=flops, transcendentals=trans, bytes_accessed=bytes_accessed),
        )(x2, w1p, b1p, w2p, b2p)

    else:
        n_i = M_p // TM
        grid = (n_i, mlp_p // TN)

        # Optionally deepen the weight-block pipeline on big-VMEM chips (v5e/v6e).
        def _weight_spec(shape, imap):
            if big_vmem and hasattr(pl, "Buffered"):
                try:
                    return pl.BlockSpec(shape, imap, pipeline_mode=pl.Buffered(3))
                except TypeError:
                    pass
            return pl.BlockSpec(shape, imap)

        w_buf = 3 if (big_vmem and hasattr(pl, "Buffered")) else 2
        est_vmem = (2 * (TM * dim_p * itemsize)                 # x tile
                    + w_buf * (dim_p * TN + TN * dim_p) * w_itemsize   # w1/w2 blocks
                    + 2 * (TM * dim_p * itemsize)               # out tile
                    + TM * dim_p * 4                            # f32 accumulator
                    + 2 * TM * TN * 4                           # GELU intermediate headroom
                    + 2 * bias_bytes)
        vmem_limit = int(min(max(est_vmem * 5 // 4, 32 * 1024 * 1024), int(0.87 * vmem_cap)))
        bytes_accessed = int(x2.size * itemsize + n_i * (wbytes + b1p.size * 4)
                             + b2p.size * 4 + M_p * dim_p * itemsize)

        out = pl.pallas_call(
            _ffn_streamed_kernel,
            out_shape=jax.ShapeDtypeStruct((M_p, dim_p), dtype),
            grid=grid,
            in_specs=[
                pl.BlockSpec((TM, dim_p), lambda i, j: (i, 0)),    # x: tiled over tokens
                _weight_spec((dim_p, TN), lambda i, j: (0, j)),    # w1 block
                pl.BlockSpec((1, TN), lambda i, j: (0, j)),        # b1 block
                _weight_spec((TN, dim_p), lambda i, j: (j, 0)),    # w2 block
                pl.BlockSpec((1, dim_p), lambda i, j: (0, 0)),     # b2
            ],
            out_specs=pl.BlockSpec((TM, dim_p), lambda i, j: (i, 0)),
            scratch_shapes=[pltpu.VMEM((TM, dim_p), jnp.float32)],
            compiler_params=pltpu.CompilerParams(
                dimension_semantics=("parallel", "arbitrary"),
                vmem_limit_bytes=vmem_limit,
            ),
            cost_estimate=pl.CostEstimate(
                flops=flops, transcendentals=trans, bytes_accessed=bytes_accessed),
        )(x2, w1p, b1p, w2p, b2p)

    return out[:M, :dim].reshape(B, S, dim)


if __name__ == "__main__":
    # Small, deterministic shapes consistent with a transformer MLP block.
    B, S, dim, mlp_dim = 2, 8, 32, 64
    key = jax.random.PRNGKey(0)
    kx, k1, kb1, k2, kb2 = jax.random.split(key, 5)

    x = jax.random.normal(kx, (B, S, dim), dtype=jnp.float32)

    # Deterministic parameter init mimicking nn.Linear's uniform(-1/sqrt(fan_in), 1/sqrt(fan_in)).
    lim1 = 1.0 / math.sqrt(dim)
    w1 = jax.random.uniform(k1, (dim, mlp_dim), jnp.float32, -lim1, lim1)   # (in, out)
    b1 = jax.random.uniform(kb1, (mlp_dim,), jnp.float32, -lim1, lim1)
    lim2 = 1.0 / math.sqrt(mlp_dim)
    w2 = jax.random.uniform(k2, (mlp_dim, dim), jnp.float32, -lim2, lim2)   # (in, out)
    b2 = jax.random.uniform(kb2, (dim,), jnp.float32, -lim2, lim2)

    # One-time parameter prep (padding/casting hoisted off the hot path).
    params = prepare_ffn_params(w1, b1, w2, b2)  # pass weight_dtype=jnp.bfloat16 for bf16 MXU path
    out = jax.block_until_ready(feed_forward(x, params))

    # Pure-JAX reference (exact-erf GELU; dropout p=0 is identity).
    h_ref = x.reshape(-1, dim) @ w1 + b1
    h_ref = 0.5 * h_ref * (1.0 + jax.lax.erf(h_ref / math.sqrt(2.0)))
    ref = (h_ref @ w2 + b2).reshape(B, S, dim)

    assert out.shape == (B, S, dim)
    max_err = float(jnp.max(jnp.abs(out - ref)))
    assert jnp.allclose(out, ref, atol=2e-5, rtol=2e-5), max_err

    print("KERNEL_OK")
</pallas_src>

<mosaic_0001>
module attributes {stable_mosaic.version = 11 : i64} {
  func.func @_ffn_resident_kernel(%arg0: i32, %arg1: memref<16x256xf32, #tpu.memory_space<vmem>>, %arg2: memref<256x256xf32, #tpu.memory_space<vmem>>, %arg3: memref<1x256xf32, #tpu.memory_space<vmem>>, %arg4: memref<256x256xf32, #tpu.memory_space<vmem>>, %arg5: memref<1x256xf32, #tpu.memory_space<vmem>>, %arg6: memref<16x256xf32, #tpu.memory_space<vmem>>) attributes {dimension_semantics = [#tpu.dimension_semantics<parallel>], iteration_bounds = array<i64: 1>, scalar_prefetch = 0 : i64, scratch_operands = 0 : i64, tpu.core_type = #tpu.core_type<tc>, window_params = [{transform_indices = @transform_0, window_bounds = array<i64: 16, 256>}, {pipeline_mode = #tpu.pipeline_mode<synchronous>, transform_indices = @transform_1, window_bounds = array<i64: 256, 256>}, {pipeline_mode = #tpu.pipeline_mode<synchronous>, transform_indices = @transform_2, window_bounds = array<i64: 1, 256>}, {pipeline_mode = #tpu.pipeline_mode<synchronous>, transform_indices = @transform_3, window_bounds = array<i64: 256, 256>}, {pipeline_mode = #tpu.pipeline_mode<synchronous>, transform_indices = @transform_4, window_bounds = array<i64: 1, 256>}, {transform_indices = @transform_5, window_bounds = array<i64: 16, 256>}]} {
    %c0 = arith.constant 0 : index
    %c0_0 = arith.constant 0 : index
    %0 = vector.load %arg1[%c0, %c0_0] : memref<16x256xf32, #tpu.memory_space<vmem>>, vector<16x256xf32>
    %c0_1 = arith.constant 0 : index
    %c0_2 = arith.constant 0 : index
    %1 = vector.load %arg2[%c0_1, %c0_2] : memref<256x256xf32, #tpu.memory_space<vmem>>, vector<256x256xf32>
    %cst = arith.constant dense<0.000000e+00> : vector<16x256xf32>
    %2 = tpu.matmul %0, %1, %cst {dimension_numbers = #tpu.dot_dimension_numbers<[1], [0], [0], [1], [0, 0, 1, 1], [], []>} : vector<16x256xf32>, vector<256x256xf32>, vector<16x256xf32> -> vector<16x256xf32>
    %c0_3 = arith.constant 0 : index
    %c0_4 = arith.constant 0 : index
    %3 = vector.load %arg3[%c0_3, %c0_4] : memref<1x256xf32, #tpu.memory_space<vmem>>, vector<1x256xf32>
    %4 = vector.broadcast %3 : vector<1x256xf32> to vector<16x256xf32>
    %5 = arith.addf %2, %4 : vector<16x256xf32>
    %cst_5 = arith.constant 5.000000e-01 : f32
    %6 = vector.broadcast %cst_5 : f32 to vector<16x256xf32>
    %7 = arith.mulf %6, %5 : vector<16x256xf32>
    %cst_6 = arith.constant 0.707106769 : f32
    %8 = vector.broadcast %cst_6 : f32 to vector<16x256xf32>
    %9 = arith.mulf %5, %8 : vector<16x256xf32>
    %10 = math.erf %9 : vector<16x256xf32>
    %cst_7 = arith.constant 1.000000e+00 : f32
    %11 = vector.broadcast %cst_7 : f32 to vector<16x256xf32>
    %12 = arith.addf %11, %10 : vector<16x256xf32>
    %13 = arith.mulf %7, %12 : vector<16x256xf32>
    %c0_8 = arith.constant 0 : index
    %c0_9 = arith.constant 0 : index
    %14 = vector.load %arg4[%c0_8, %c0_9] : memref<256x256xf32, #tpu.memory_space<vmem>>, vector<256x256xf32>
    %cst_10 = arith.constant dense<0.000000e+00> : vector<16x256xf32>
    %15 = tpu.matmul %13, %14, %cst_10 {dimension_numbers = #tpu.dot_dimension_numbers<[1], [0], [0], [1], [0, 0, 1, 1], [], []>} : vector<16x256xf32>, vector<256x256xf32>, vector<16x256xf32> -> vector<16x256xf32>
    %c0_11 = arith.constant 0 : index
    %c0_12 = arith.constant 0 : index
    %16 = vector.load %arg5[%c0_11, %c0_12] : memref<1x256xf32, #tpu.memory_space<vmem>>, vector<1x256xf32>
    %17 = vector.broadcast %16 : vector<1x256xf32> to vector<16x256xf32>
    %18 = arith.addf %15, %17 : vector<16x256xf32>
    %c0_13 = arith.constant 0 : index
    %c0_14 = arith.constant 0 : index
    %19 = vector.load %arg6[%c0_13, %c0_14] : memref<16x256xf32, #tpu.memory_space<vmem>>, vector<16x256xf32>
    tpu.vector_store %arg6[%c0_13, %c0_14], %18 {strides = array<i32>} : memref<16x256xf32, #tpu.memory_space<vmem>>, vector<16x256xf32>,
    return
  }
  func.func @transform_0(%arg0: i32) -> (i32, i32) {
    %c0_i32 = arith.constant 0 : i32
    %c0_i32_0 = arith.constant 0 : i32
    return %arg0, %c0_i32 : i32, i32
  }
  func.func @transform_1(%arg0: i32) -> (i32, i32) {
    %c0_i32 = arith.constant 0 : i32
    %c0_i32_0 = arith.constant 0 : i32
    %c0_i32_1 = arith.constant 0 : i32
    return %c0_i32, %c0_i32_0 : i32, i32
  }
  func.func @transform_2(%arg0: i32) -> (i32, i32) {
    %c0_i32 = arith.constant 0 : i32
    %c0_i32_0 = arith.constant 0 : i32
    %c0_i32_1 = arith.constant 0 : i32
    return %c0_i32, %c0_i32_0 : i32, i32
  }
  func.func @transform_3(%arg0: i32) -> (i32, i32) {
    %c0_i32 = arith.constant 0 : i32
    %c0_i32_0 = arith.constant 0 : i32
    %c0_i32_1 = arith.constant 0 : i32
    return %c0_i32, %c0_i32_0 : i32, i32
  }
  func.func @transform_4(%arg0: i32) -> (i32, i32) {
    %c0_i32 = arith.constant 0 : i32
    %c0_i32_0 = arith.constant 0 : i32
    %c0_i32_1 = arith.constant 0 : i32
    return %c0_i32, %c0_i32_0 : i32, i32
  }
  func.func @transform_5(%arg0: i32) -> (i32, i32) {
    %c0_i32 = arith.constant 0 : i32
    %c0_i32_0 = arith.constant 0 : i32
    return %arg0, %c0_i32 : i32, i32
  }
}

</mosaic_0001>

<llo_original>
// kernel: tpu_custom_call.1
$region0: #{tpu_custom_call.1}
  #allocation0 [shape = 'u32[]', space=smem, size = 0x4, offset = 0x4, fixed_abs, tag = 'smem constant byte address 0x4 - core index']
  #allocation1 [shape = 'u32[144,128]{1,0:T(1,128)}', space=vmem, size = 0x12000, scoped, tag = 'internal scratch']
  %s0 = inlined_call_operand.hbm [shape: f32[16,256], index: 0, kind: input, shape index: {}]
  %s1 = inlined_call_operand.hbm [shape: f32[256,256], index: 1, kind: input, shape index: {}]
  %s2 = inlined_call_operand.vmem [shape: f32[1,256], index: 2, kind: input, shape index: {}]
  %s3 = inlined_call_operand.hbm [shape: f32[256,256], index: 3, kind: input, shape index: {}]
  %s4 = inlined_call_operand.vmem [shape: f32[1,256], index: 4, kind: input, shape index: {}]
  %s5 = inlined_call_operand.hbm [shape: f32[16,256], index: 5, kind: output, shape index: {}]
  %s6 = sld [smem:[#allocation0]]
  $region42: #{tpu_custom_call.1} parent=0
    _
  %s8 = ssub.s32 1, %s6
  %s9 = scalar_select 0, %s8, %s6
  $region1: #{tpu_custom_call.1} parent=0
    #allocation2 [shape = 'u8[16384]{0}', space=vmem, size = 0x4000, scoped, tag = 'input window, operand 0, single buffered']
    #allocation3 [shape = 's32[1]{0}', space=sflag, size = 0x4, scoped, tag = 'scoped memory for tpu_custom_call.1']
    #allocation4 [shape = 's32[1]{0}', space=sflag, size = 0x4, scoped, tag = 'scoped memory for tpu_custom_call.1']
    #allocation5 [shape = 'u8[262144]{0}', space=vmem, size = 0x40000, scoped, tag = 'input window, operand 1, single buffered']
    #allocation6 [shape = 's32[1]{0}', space=sflag, size = 0x4, scoped, tag = 'scoped memory for tpu_custom_call.1']
    #allocation7 [shape = 'u8[262144]{0}', space=vmem, size = 0x40000, scoped, tag = 'input window, operand 3, single buffered']
    #allocation8 [shape = 'u8[16384]{0}', space=vmem, size = 0x4000, scoped, tag = 'output window, operand 0, single buffered']
    %10 = vsyncpa [#allocation3], 0
    %11 = vsyncpa [#allocation6], 0
    %12 = vsyncpa [#allocation4], 0
    // Predicated region
    $region2: #{tpu_custom_call.1} parent=1 // pred_check
      _
    $region3: #{tpu_custom_call.1} parent=1 // pred_check_branch
      %14 = sbr.rel (0) target = $region5
    $region4: #{tpu_custom_call.1} parent=1 // pred_region
      %s16 = ssub.s32 512, 512
      %17 = vsyncadd [#allocation3], %s16
      %s18 = sshll.u32 [#allocation2], 4
      %s19 = int_to_ptr.vmem [resolvable:$true] %s18
      %24 = dma.hbm_to_vmem [thread:$0]  %s0, 512, %s19, [#allocation3], 256, 256, 16
    $region5: #{tpu_custom_call.1} parent=1 // pred_fallthru
      _
    // Predicated region
    $region6: #{tpu_custom_call.1} parent=1 // pred_check
      _
    $region7: #{tpu_custom_call.1} parent=1 // pred_check_branch
      %26 = sbr.rel (0) target = $region9
    $region8: #{tpu_custom_call.1} parent=1 // pred_region
      %s28 = ssub.s32 8192, 8192
      %29 = vsyncadd [#allocation6], %s28
      %s30 = sshll.u32 [#allocation5], 4
      %s31 = int_to_ptr.vmem [resolvable:$true] %s30
      %36 = dma.hbm_to_vmem [thread:$0]  %s1, 8192, %s31, [#allocation6], 256, 256, 16
    $region9: #{tpu_custom_call.1} parent=1 // pred_fallthru
      _
    // Predicated region
    $region10: #{tpu_custom_call.1} parent=1 // pred_check
      _
    $region11: #{tpu_custom_call.1} parent=1 // pred_check_branch
      %38 = sbr.rel (0) target = $region13
    $region12: #{tpu_custom_call.1} parent=1 // pred_region
      _
    $region13: #{tpu_custom_call.1} parent=1 // pred_fallthru
      _
    // Predicated region
    $region14: #{tpu_custom_call.1} parent=1 // pred_check
      _
    $region15: #{tpu_custom_call.1} parent=1 // pred_check_branch
      %40 = sbr.rel (0) target = $region17
    $region16: #{tpu_custom_call.1} parent=1 // pred_region
      %s42 = ssub.s32 8192, 8192
      %43 = vsyncadd [#allocation6], %s42
      %s44 = sshll.u32 [#allocation7], 4
      %s45 = int_to_ptr.vmem [resolvable:$true] %s44
      %50 = dma.hbm_to_vmem [thread:$0]  %s3, 8192, %s45, [#allocation6], 256, 256, 16
    $region17: #{tpu_custom_call.1} parent=1 // pred_fallthru
      _
    // Predicated region
    $region18: #{tpu_custom_call.1} parent=1 // pred_check
      _
    $region19: #{tpu_custom_call.1} parent=1 // pred_check_branch
      %52 = sbr.rel (0) target = $region21
    $region20: #{tpu_custom_call.1} parent=1 // pred_region
      _
    $region21: #{tpu_custom_call.1} parent=1 // pred_fallthru
      _
    // Predicated region
    $region22: #{tpu_custom_call.1} parent=1 // pred_check
      _
    $region23: #{tpu_custom_call.1} parent=1 // pred_check_branch
      %54 = sbr.rel (0) target = $region25
    $region24: #{tpu_custom_call.1} parent=1 // pred_region
      %55 = dma.done [#allocation3], 512
    $region25: #{tpu_custom_call.1} parent=1 // pred_fallthru
      _
    // Predicated region
    $region26: #{tpu_custom_call.1} parent=1 // pred_check
      _
    $region27: #{tpu_custom_call.1} parent=1 // pred_check_branch
      %57 = sbr.rel (0) target = $region29
    $region28: #{tpu_custom_call.1} parent=1 // pred_region
      %58 = dma.done [#allocation6], 8192
    $region29: #{tpu_custom_call.1} parent=1 // pred_fallthru
      _
    // Predicated region
    $region30: #{tpu_custom_call.1} parent=1 // pred_check
      _
    $region31: #{tpu_custom_call.1} parent=1 // pred_check_branch
      %60 = sbr.rel (0) target = $region33
    $region32: #{tpu_custom_call.1} parent=1 // pred_region
      %61 = dma.done [#allocation6], 8192
    $region33: #{tpu_custom_call.1} parent=1 // pred_fallthru
      _
    %v62 = vld [vmem:[#allocation2] sm:$0xff]
    %v63 = vld [vmem:[#allocation2 + $0x8] sm:$0xff]
    %v64 = vld [vmem:[#allocation2 + $0x10] sm:$0xff]
    %v65 = vld [vmem:[#allocation2 + $0x18] sm:$0xff]
    %v66 = vld [vmem:[#allocation5] sm:$0xff]
    %v67 = vld [vmem:[#allocation5 + $0x8] sm:$0xff]
    %v68 = vld [vmem:[#allocation5 + $0x10] sm:$0xff]
    %v69 = vld [vmem:[#allocation5 + $0x18] sm:$0xff]
    %v70 = vld [vmem:[#allocation5 + $0x20] sm:$0xff]
    %v71 = vld [vmem:[#allocation5 + $0x28] sm:$0xff]
    %v72 = vld [vmem:[#allocation5 + $0x30] sm:$0xff]
    %v73 = vld [vmem:[#allocation5 + $0x38] sm:$0xff]
    %v74 = vld [vmem:[#allocation5 + $0x40] sm:$0xff]
    %v75 = vld [vmem:[#allocation5 + $0x48] sm:$0xff]
    %v76 = vld [vmem:[#allocation5 + $0x50] sm:$0xff]
    %v77 = vld [vmem:[#allocation5 + $0x58] sm:$0xff]
    %v78 = vld [vmem:[#allocation5 + $0x60] sm:$0xff]
    %v79 = vld [vmem:[#allocation5 + $0x68] sm:$0xff]
    %v80 = vld [vmem:[#allocation5 + $0x70] sm:$0xff]
    %v81 = vld [vmem:[#allocation5 + $0x78] sm:$0xff]
    %v82 = vld [vmem:[#allocation5 + $0x80] sm:$0xff]
    %v83 = vld [vmem:[#allocation5 + $0x88] sm:$0xff]
    %v84 = vld [vmem:[#allocation5 + $0x90] sm:$0xff]
    %v85 = vld [vmem:[#allocation5 + $0x98] sm:$0xff]
    %v86 = vld [vmem:[#allocation5 + $0xa0] sm:$0xff]
    %v87 = vld [vmem:[#allocation5 + $0xa8] sm:$0xff]
    %v88 = vld [vmem:[#allocation5 + $0xb0] sm:$0xff]
    %v89 = vld [vmem:[#allocation5 + $0xb8] sm:$0xff]
    %v90 = vld [vmem:[#allocation5 + $0xc0] sm:$0xff]
    %v91 = vld [vmem:[#allocation5 + $0xc8] sm:$0xff]
    %v92 = vld [vmem:[#allocation5 + $0xd0] sm:$0xff]
    %v93 = vld [vmem:[#allocation5 + $0xd8] sm:$0xff]
    %v94 = vld [vmem:[#allocation5 + $0xe0] sm:$0xff]
    %v95 = vld [vmem:[#allocation5 + $0xe8] sm:$0xff]
    %v96 = vld [vmem:[#allocation5 + $0xf0] sm:$0xff]
    %v97 = vld [vmem:[#allocation5 + $0xf8] sm:$0xff]
    %v98 = vld [vmem:[#allocation5 + $0x100] sm:$0xff]
    %v99 = vld [vmem:[#allocation5 + $0x108] sm:$0xff]
    %v100 = vld [vmem:[#allocation5 + $0x110] sm:$0xff]
    %v101 = vld [vmem:[#allocation5 + $0x118] sm:$0xff]
    %v102 = vld [vmem:[#allocation5 + $0x120] sm:$0xff]
    %v103 = vld [vmem:[#allocation5 + $0x128] sm:$0xff]
    %v104 = vld [vmem:[#allocation5 + $0x130] sm:$0xff]
    %v105 = vld [vmem:[#allocation5 + $0x138] sm:$0xff]
    %v106 = vld [vmem:[#allocation5 + $0x140] sm:$0xff]
    %v107 = vld [vmem:[#allocation5 + $0x148] sm:$0xff]
    %v108 = vld [vmem:[#allocation5 + $0x150] sm:$0xff]
    %v109 = vld [vmem:[#allocation5 + $0x158] sm:$0xff]
    %v110 = vld [vmem:[#allocation5 + $0x160] sm:$0xff]
    %v111 = vld [vmem:[#allocation5 + $0x168] sm:$0xff]
    %v112 = vld [vmem:[#allocation5 + $0x170] sm:$0xff]
    %v113 = vld [vmem:[#allocation5 + $0x178] sm:$0xff]
    %v114 = vld [vmem:[#allocation5 + $0x180] sm:$0xff]
    %v115 = vld [vmem:[#allocation5 + $0x188] sm:$0xff]
    %v116 = vld [vmem:[#allocation5 + $0x190] sm:$0xff]
    %v117 = vld [vmem:[#allocation5 + $0x198] sm:$0xff]
    %v118 = vld [vmem:[#allocation5 + $0x1a0] sm:$0xff]
    %v119 = vld [vmem:[#allocation5 + $0x1a8] sm:$0xff]
    %v120 = vld [vmem:[#allocation5 + $0x1b0] sm:$0xff]
    %v121 = vld [vmem:[#allocation5 + $0x1b8] sm:$0xff]
    %v122 = vld [vmem:[#allocation5 + $0x1c0] sm:$0xff]
    %v123 = vld [vmem:[#allocation5 + $0x1c8] sm:$0xff]
    %v124 = vld [vmem:[#allocation5 + $0x1d0] sm:$0xff]
    %v125 = vld [vmem:[#allocation5 + $0x1d8] sm:$0xff]
    %v126 = vld [vmem:[#allocation5 + $0x1e0] sm:$0xff]
    %v127 = vld [vmem:[#allocation5 + $0x1e8] sm:$0xff]
    %v128 = vld [vmem:[#allocation5 + $0x1f0] sm:$0xff]
    %v129 = vld [vmem:[#allocation5 + $0x1f8] sm:$0xff]
    %v130 = vld [vmem:[%s2] sm:$0x3]
    %v132 = vlaneseq
    %v133 = vshrl.u32 %v132, 7
    %v134 = vsub.s32 0, %v133
    %v135 = vrot.slane %v130, %v134
    %v136 = vlaneseq
    %v137 = vshrl.u32 %v136, 7
    %v138 = vsub.s32 1, %v137
    %v139 = vrot.slane %v130, %v138
    %142 = vmatprep.subr.mxu0 %v97
    %143 = vmatpush1.msra.mxu0 %v96
    %144 = vmatprep.subr.mxu0 %v95
    %145 = vmatpush1.msra.mxu0 %v94
    %146 = vmatprep.subr.mxu0 %v93
    %147 = vmatpush1.msra.mxu0 %v92
    %148 = vmatprep.subr.mxu0 %v91
    %149 = vmatpush1.msra.mxu0 %v90
    %150 = vmatprep.subr.mxu0 %v89
    %151 = vmatpush1.msra.mxu0 %v88
    %152 = vmatprep.subr.mxu0 %v87
    %153 = vmatpush1.msra.mxu0 %v86
    %154 = vmatprep.subr.mxu0 %v85
    %155 = vmatpush1.msra.mxu0 %v84
    %156 = vmatprep.subr.mxu0 %v83
    %157 = vmatpush1.msra.mxu0 %v82
    %158 = vmatprep.subr.mxu0 %v81
    %159 = vmatpush1.msra.mxu0 %v80
    %160 = vmatprep.subr.mxu0 %v79
    %161 = vmatpush1.msra.mxu0 %v78
    %162 = vmatprep.subr.mxu0 %v77
    %163 = vmatpush1.msra.mxu0 %v76
    %164 = vmatprep.subr.mxu0 %v75
    %165 = vmatpush1.msra.mxu0 %v74
    %166 = vmatprep.subr.mxu0 %v73
    %167 = vmatpush1.msra.mxu0 %v72
    %168 = vmatprep.subr.mxu0 %v71
    %169 = vmatpush1.msra.mxu0 %v70
    %170 = vmatprep.subr.mxu0 %v69
    %171 = vmatpush1.msra.mxu0 %v68
    %172 = vmatprep.subr.mxu0 %v67
    %173 = vmatpush1.msra.mxu0 %v66
    %174 = vmatprep.subr.mxu0 %v129
    %175 = vmatpush2.msra.mxu0 %v128
    %176 = vmatprep.subr.mxu0 %v127
    %177 = vmatpush2.msra.mxu0 %v126
    %178 = vmatprep.subr.mxu0 %v125
    %179 = vmatpush2.msra.mxu0 %v124
    %180 = vmatprep.subr.mxu0 %v123
    %181 = vmatpush2.msra.mxu0 %v122
    %182 = vmatprep.subr.mxu0 %v121
    %183 = vmatpush2.msra.mxu0 %v120
    %184 = vmatprep.subr.mxu0 %v119
    %185 = vmatpush2.msra.mxu0 %v118
    %186 = vmatprep.subr.mxu0 %v117
    %187 = vmatpush2.msra.mxu0 %v116
    %188 = vmatprep.subr.mxu0 %v115
    %189 = vmatpush2.msra.mxu0 %v114
    %190 = vmatprep.subr.mxu0 %v113
    %191 = vmatpush2.msra.mxu0 %v112
    %192 = vmatprep.subr.mxu0 %v111
    %193 = vmatpush2.msra.mxu0 %v110
    %194 = vmatprep.subr.mxu0 %v109
    %195 = vmatpush2.msra.mxu0 %v108
    %196 = vmatprep.subr.mxu0 %v107
    %197 = vmatpush2.msra.mxu0 %v106
    %198 = vmatprep.subr.mxu0 %v105
    %199 = vmatpush2.msra.mxu0 %v104
    %200 = vmatprep.subr.mxu0 %v103
    %201 = vmatpush2.msra.mxu0 %v102
    %202 = vmatprep.subr.mxu0 %v101
    %203 = vmatpush2.msra.mxu0 %v100
    %204 = vmatprep.subr.mxu0 %v99
    %205 = vmatpush2.msra.mxu0 %v98
    %206 = vmatprep.mubr.f32.mxu0 %v63
    %207 = vmatmul.mubr.f32.gmra.mxu0 %v62
    %v208 = vpop.f32.mrf.mxu0
    %v209 = vadd.f32 %v135, %v208
    %v210 = vpop.f32.mrf.mxu0
    %v211 = vadd.f32 %v139, %v210
    %212 = vmatprep.mubr.f32.mxu0 %v65
    %213 = vmatmul.mubr.f32.gmra.mxu0 %v64
    %v214 = vpop.f32.mrf.mxu0
    %v215 = vadd.f32 %v135, %v214
    %v216 = vpop.f32.mrf.mxu0
    %v217 = vadd.f32 %v139, %v216
    %218 = vdwg.mxu0
    %v219 = vmul.f32 %v209, 0.5
    %v220 = vmul.f32 %v211, 0.5
    %v221 = vmul.f32 %v215, 0.5
    %v222 = vmul.f32 %v217, 0.5
    %v223 = vmul.f32 %v209, 0.70710677
    %v224 = vmul.f32 %v211, 0.70710677
    %v225 = vmul.f32 %v215, 0.70710677
    %v226 = vmul.f32 %v217, 0.70710677
    %v227 = verf.f32.pop %v223
    %v228 = verf.f32.pop %v224
    %v229 = verf.f32.pop %v225
    %v230 = verf.f32.pop %v226
    %v231 = vadd.f32 %v227, 1.0
    %v232 = vadd.f32 %v228, 1.0
    %v233 = vadd.f32 %v229, 1.0
    %v234 = vadd.f32 %v230, 1.0
    %v235 = vmul.f32 %v219, %v231
    %v236 = vmul.f32 %v220, %v232
    %v237 = vmul.f32 %v221, %v233
    %v238 = vmul.f32 %v222, %v234
    %v239 = vld [vmem:[#allocation7] sm:$0xff]
    %v240 = vld [vmem:[#allocation7 + $0x8] sm:$0xff]
    %v241 = vld [vmem:[#allocation7 + $0x10] sm:$0xff]
    %v242 = vld [vmem:[#allocation7 + $0x18] sm:$0xff]
    %v243 = vld [vmem:[#allocation7 + $0x20] sm:$0xff]
    %v244 = vld [vmem:[#allocation7 + $0x28] sm:$0xff]
    %v245 = vld [vmem:[#allocation7 + $0x30] sm:$0xff]
    %v246 = vld [vmem:[#allocation7 + $0x38] sm:$0xff]
    %v247 = vld [vmem:[#allocation7 + $0x40] sm:$0xff]
    %v248 = vld [vmem:[#allocation7 + $0x48] sm:$0xff]
    %v249 = vld [vmem:[#allocation7 + $0x50] sm:$0xff]
    %v250 = vld [vmem:[#allocation7 + $0x58] sm:$0xff]
    %v251 = vld [vmem:[#allocation7 + $0x60] sm:$0xff]
    %v252 = vld [vmem:[#allocation7 + $0x68] sm:$0xff]
    %v253 = vld [vmem:[#allocation7 + $0x70] sm:$0xff]
    %v254 = vld [vmem:[#allocation7 + $0x78] sm:$0xff]
    %v255 = vld [vmem:[#allocation7 + $0x80] sm:$0xff]
    %v256 = vld [vmem:[#allocation7 + $0x88] sm:$0xff]
    %v257 = vld [vmem:[#allocation7 + $0x90] sm:$0xff]
    %v258 = vld [vmem:[#allocation7 + $0x98] sm:$0xff]
    %v259 = vld [vmem:[#allocation7 + $0xa0] sm:$0xff]
    %v260 = vld [vmem:[#allocation7 + $0xa8] sm:$0xff]
    %v261 = vld [vmem:[#allocation7 + $0xb0] sm:$0xff]
    %v262 = vld [vmem:[#allocation7 + $0xb8] sm:$0xff]
    %v263 = vld [vmem:[#allocation7 + $0xc0] sm:$0xff]
    %v264 = vld [vmem:[#allocation7 + $0xc8] sm:$0xff]
    %v265 = vld [vmem:[#allocation7 + $0xd0] sm:$0xff]
    %v266 = vld [vmem:[#allocation7 + $0xd8] sm:$0xff]
    %v267 = vld [vmem:[#allocation7 + $0xe0] sm:$0xff]
    %v268 = vld [vmem:[#allocation7 + $0xe8] sm:$0xff]
    %v269 = vld [vmem:[#allocation7 + $0xf0] sm:$0xff]
    %v270 = vld [vmem:[#allocation7 + $0xf8] sm:$0xff]
    %v271 = vld [vmem:[#allocation7 + $0x100] sm:$0xff]
    %v272 = vld [vmem:[#allocation7 + $0x108] sm:$0xff]
    %v273 = vld [vmem:[#allocation7 + $0x110] sm:$0xff]
    %v274 = vld [vmem:[#allocation7 + $0x118] sm:$0xff]
    %v275 = vld [vmem:[#allocation7 + $0x120] sm:$0xff]
    %v276 = vld [vmem:[#allocation7 + $0x128] sm:$0xff]
    %v277 = vld [vmem:[#allocation7 + $0x130] sm:$0xff]
    %v278 = vld [vmem:[#allocation7 + $0x138] sm:$0xff]
    %v279 = vld [vmem:[#allocation7 + $0x140] sm:$0xff]
    %v280 = vld [vmem:[#allocation7 + $0x148] sm:$0xff]
    %v281 = vld [vmem:[#allocation7 + $0x150] sm:$0xff]
    %v282 = vld [vmem:[#allocation7 + $0x158] sm:$0xff]
    %v283 = vld [vmem:[#allocation7 + $0x160] sm:$0xff]
    %v284 = vld [vmem:[#allocation7 + $0x168] sm:$0xff]
    %v285 = vld [vmem:[#allocation7 + $0x170] sm:$0xff]
    %v286 = vld [vmem:[#allocation7 + $0x178] sm:$0xff]
    %v287 = vld [vmem:[#allocation7 + $0x180] sm:$0xff]
    %v288 = vld [vmem:[#allocation7 + $0x188] sm:$0xff]
    %v289 = vld [vmem:[#allocation7 + $0x190] sm:$0xff]
    %v290 = vld [vmem:[#allocation7 + $0x198] sm:$0xff]
    %v291 = vld [vmem:[#allocation7 + $0x1a0] sm:$0xff]
    %v292 = vld [vmem:[#allocation7 + $0x1a8] sm:$0xff]
    %v293 = vld [vmem:[#allocation7 + $0x1b0] sm:$0xff]
    %v294 = vld [vmem:[#allocation7 + $0x1b8] sm:$0xff]
    %v295 = vld [vmem:[#allocation7 + $0x1c0] sm:$0xff]
    %v296 = vld [vmem:[#allocation7 + $0x1c8] sm:$0xff]
    %v297 = vld [vmem:[#allocation7 + $0x1d0] sm:$0xff]
    %v298 = vld [vmem:[#allocation7 + $0x1d8] sm:$0xff]
    %v299 = vld [vmem:[#allocation7 + $0x1e0] sm:$0xff]
    %v300 = vld [vmem:[#allocation7 + $0x1e8] sm:$0xff]
    %v301 = vld [vmem:[#allocation7 + $0x1f0] sm:$0xff]
    %v302 = vld [vmem:[#allocation7 + $0x1f8] sm:$0xff]
    %v303 = vld [vmem:[%s4] sm:$0x3]
    %v305 = vlaneseq
    %v306 = vshrl.u32 %v305, 7
    %v307 = vsub.s32 0, %v306
    %v308 = vrot.slane %v303, %v307
    %v309 = vlaneseq
    %v310 = vshrl.u32 %v309, 7
    %v311 = vsub.s32 1, %v310
    %v312 = vrot.slane %v303, %v311
    %315 = vmatprep.subr.mxu0 %v270
    %316 = vmatpush1.msra.mxu0 %v269
    %317 = vmatprep.subr.mxu0 %v268
    %318 = vmatpush1.msra.mxu0 %v267
    %319 = vmatprep.subr.mxu0 %v266
    %320 = vmatpush1.msra.mxu0 %v265
    %321 = vmatprep.subr.mxu0 %v264
    %322 = vmatpush1.msra.mxu0 %v263
    %323 = vmatprep.subr.mxu0 %v262
    %324 = vmatpush1.msra.mxu0 %v261
    %325 = vmatprep.subr.mxu0 %v260
    %326 = vmatpush1.msra.mxu0 %v259
    %327 = vmatprep.subr.mxu0 %v258
    %328 = vmatpush1.msra.mxu0 %v257
    %329 = vmatprep.subr.mxu0 %v256
    %330 = vmatpush1.msra.mxu0 %v255
    %331 = vmatprep.subr.mxu0 %v254
    %332 = vmatpush1.msra.mxu0 %v253
    %333 = vmatprep.subr.mxu0 %v252
    %334 = vmatpush1.msra.mxu0 %v251
    %335 = vmatprep.subr.mxu0 %v250
    %336 = vmatpush1.msra.mxu0 %v249
    %337 = vmatprep.subr.mxu0 %v248
    %338 = vmatpush1.msra.mxu0 %v247
    %339 = vmatprep.subr.mxu0 %v246
    %340 = vmatpush1.msra.mxu0 %v245
    %341 = vmatprep.subr.mxu0 %v244
    %342 = vmatpush1.msra.mxu0 %v243
    %343 = vmatprep.subr.mxu0 %v242
    %344 = vmatpush1.msra.mxu0 %v241
    %345 = vmatprep.subr.mxu0 %v240
    %346 = vmatpush1.msra.mxu0 %v239
    %347 = vmatprep.subr.mxu0 %v302
    %348 = vmatpush2.msra.mxu0 %v301
    %349 = vmatprep.subr.mxu0 %v300
    %350 = vmatpush2.msra.mxu0 %v299
    %351 = vmatprep.subr.mxu0 %v298
    %352 = vmatpush2.msra.mxu0 %v297
    %353 = vmatprep.subr.mxu0 %v296
    %354 = vmatpush2.msra.mxu0 %v295
    %355 = vmatprep.subr.mxu0 %v294
    %356 = vmatpush2.msra.mxu0 %v293
    %357 = vmatprep.subr.mxu0 %v292
    %358 = vmatpush2.msra.mxu0 %v291
    %359 = vmatprep.subr.mxu0 %v290
    %360 = vmatpush2.msra.mxu0 %v289
    %361 = vmatprep.subr.mxu0 %v288
    %362 = vmatpush2.msra.mxu0 %v287
    %363 = vmatprep.subr.mxu0 %v286
    %364 = vmatpush2.msra.mxu0 %v285
    %365 = vmatprep.subr.mxu0 %v284
    %366 = vmatpush2.msra.mxu0 %v283
    %367 = vmatprep.subr.mxu0 %v282
    %368 = vmatpush2.msra.mxu0 %v281
    %369 = vmatprep.subr.mxu0 %v280
    %370 = vmatpush2.msra.mxu0 %v279
    %371 = vmatprep.subr.mxu0 %v278
    %372 = vmatpush2.msra.mxu0 %v277
    %373 = vmatprep.subr.mxu0 %v276
    %374 = vmatpush2.msra.mxu0 %v275
    %375 = vmatprep.subr.mxu0 %v274
    %376 = vmatpush2.msra.mxu0 %v273
    %377 = vmatprep.subr.mxu0 %v272
    %378 = vmatpush2.msra.mxu0 %v271
    %379 = vmatprep.mubr.f32.mxu0 %v236
    %380 = vmatmul.mubr.f32.gmra.mxu0 %v235
    %v381 = vpop.f32.mrf.mxu0
    %v382 = vadd.f32 %v308, %v381
    %v383 = vpop.f32.mrf.mxu0
    %v384 = vadd.f32 %v312, %v383
    %385 = vmatprep.mubr.f32.mxu0 %v238
    %386 = vmatmul.mubr.f32.gmra.mxu0 %v237
    %v387 = vpop.f32.mrf.mxu0
    %v388 = vadd.f32 %v308, %v387
    %v389 = vpop.f32.mrf.mxu0
    %v390 = vadd.f32 %v312, %v389
    %391 = vdwg.mxu0
    %392 = vst [vmem:[#allocation8] sm:$0xff] %v382
    %393 = vst [vmem:[#allocation8 + $0x8] sm:$0xff] %v384
    %394 = vst [vmem:[#allocation8 + $0x10] sm:$0xff] %v388
    %395 = vst [vmem:[#allocation8 + $0x18] sm:$0xff] %v390
    // Predicated region
    $region34: #{tpu_custom_call.1} parent=1 // pred_check
      _
    $region35: #{tpu_custom_call.1} parent=1 // pred_check_branch
      %397 = sbr.rel (0) target = $region37
    $region36: #{tpu_custom_call.1} parent=1 // pred_region
      %s399 = ssub.s32 512, 512
      %400 = vsyncadd [#allocation4], %s399
      %s401 = sshll.u32 [#allocation8], 4
      %s402 = int_to_ptr.vmem [resolvable:$true] %s401
      %407 = dma.vmem_to_hbm [thread:$0]  %s402, 512, %s5, [#allocation4], 256, 256, 16
    $region37: #{tpu_custom_call.1} parent=1 // pred_fallthru
      _
    // Predicated region
    $region38: #{tpu_custom_call.1} parent=1 // pred_check
      _
    $region39: #{tpu_custom_call.1} parent=1 // pred_check_branch
      %409 = sbr.rel (0) target = $region41
    $region40: #{tpu_custom_call.1} parent=1 // pred_region
      %410 = dma.done [#allocation4], 512
    $region41: #{tpu_custom_call.1} parent=1 // pred_fallthru
      _
    %411 = vsyncpa [#allocation3], 1
    %412 = vsyncpa [#allocation6], 1
    %413 = vsyncpa [#allocation4], 1

</llo_original>
